<compile_context>
chip_gen: v7x
topology: tpu7x:2x2x1
jax: 0.10.0
libtpu: 0.0.40
codegen_flags: <defaults>
</compile_context>

<pallas_src>
import functools

import jax
import jax.numpy as jnp
from jax.experimental import pallas as pl
from jax.experimental.pallas import tpu as pltpu


def _round_up(x, m):
    return ((x + m - 1) // m) * m


def _laplace_kernel_body(x1_ref, x2_ref, x1n_ref, x2n_ref, o_ref, *, inv_sigma2):
    # x1_ref : (tile_n, d)   row-major tile of X^T
    # x2_ref : (tile_m, d)   row-major tile of Y^T
    # x1n_ref: (tile_n, 1)   precomputed ||x_i||^2
    # x2n_ref: (1, tile_m)   precomputed ||y_j||^2
    # o_ref  : (tile_n, tile_m)
    gram = jax.lax.dot_general(
        x1_ref[...], x2_ref[...],
        dimension_numbers=(((1,), (1,)), ((), ())),    # contract d on both sides
        preferred_element_type=jnp.float32)            # (tile_n, tile_m) on the MXU

    # torch.addmm(x2_norm.T, x1, x2.T, alpha=-2).add_(x1_norm)
    d2 = x1n_ref[...] + x2n_ref[...] - 2.0 * gram
    d2 = jnp.maximum(d2, 1e-30)                        # clamp_min_(1e-30)
    dist = jnp.sqrt(d2)                                # sqrt_()
    o_ref[...] = jnp.exp(dist * (-inv_sigma2)).astype(o_ref.dtype)


def laplace_kernel_matrix(X, Y=None, *, sigma2=50.0, tile_n=256, tile_m=512,
                          out_dtype=jnp.float32):
    """X: (d, N), Y: (d, M) (defaults to X). Returns the (N, M) Laplace kernel."""
    X = jnp.asarray(X, jnp.float32)
    if X.ndim == 1:
        X = X[:, None]
    d, N = X.shape

    x1 = X.T                                   # (N, d), sample-major
    if Y is None:
        x2 = x1                                # reuse: one transpose / one norm pass
        M = N
    else:
        Y = jnp.asarray(Y, jnp.float32)
        if Y.ndim == 1:
            Y = Y[:, None]
        M = Y.shape[1]
        x2 = Y.T                               # (M, d)

    # Norms hoisted out of the kernel (computed once; tiny to DMA).
    x1n = jnp.sum(x1 * x1, axis=-1, keepdims=True)                             # (N, 1)
    x2n = x1n.T if Y is None else jnp.sum(x2 * x2, axis=-1, keepdims=True).T   # (1, M)

    # Tile sizes: output tiles lane-dense (tile_m mult. of 128), tile_n mult. of 8.
    tile_n = min(tile_n, _round_up(N, 8))
    tile_m = min(tile_m, _round_up(M, 128))
    Np = _round_up(N, tile_n)
    Mp = _round_up(M, tile_m)

    x1p = x1 if Np == N else jnp.pad(x1, ((0, Np - N), (0, 0)))
    x2p = x2 if Mp == M else jnp.pad(x2, ((0, Mp - M), (0, 0)))
    x1np = x1n if Np == N else jnp.pad(x1n, ((0, Np - N), (0, 0)))
    x2np = x2n if Mp == M else jnp.pad(x2n, ((0, 0), (0, Mp - M)))

    kernel = functools.partial(_laplace_kernel_body,
                               inv_sigma2=float(1.0 / float(sigma2)))

    out = pl.pallas_call(
        kernel,
        out_shape=jax.ShapeDtypeStruct((Np, Mp), out_dtype),
        grid_spec=pl.GridSpec(
            grid=(Np // tile_n, Mp // tile_m),
            in_specs=[
                pl.BlockSpec((tile_n, d), lambda i, j: (i, 0)),   # X^T tile
                pl.BlockSpec((tile_m, d), lambda i, j: (j, 0)),   # Y^T tile
                pl.BlockSpec((tile_n, 1), lambda i, j: (i, 0)),   # ||x||^2 tile
                pl.BlockSpec((1, tile_m), lambda i, j: (0, j)),   # ||y||^2 tile
            ],
            out_specs=pl.BlockSpec((tile_n, tile_m), lambda i, j: (i, j)),
        ),
        compiler_params=pltpu.CompilerParams(
            dimension_semantics=("parallel", "parallel")),
    )(x1p, x2p, x1np, x2np)

    if Np != N or Mp != M:
        out = out[:N, :M]
    return out


def _reference(X, Y, sigma2):
    x1 = jnp.asarray(X, jnp.float32).T
    x2 = jnp.asarray(Y, jnp.float32).T
    x1n = jnp.sum(x1 ** 2, axis=-1, keepdims=True)
    x2n = jnp.sum(x2 ** 2, axis=-1, keepdims=True)
    gram = jnp.dot(x1, x2.T, precision=jax.lax.Precision.HIGHEST)
    d2 = jnp.maximum(x1n + x2n.T - 2.0 * gram, 1e-30)
    return jnp.exp(-jnp.sqrt(d2) / sigma2)


if __name__ == "__main__":
    # Module stores sigma2 = 50.0 as a non-trainable Parameter.
    sigma2 = 50.0

    key = jax.random.PRNGKey(0)
    kx, ky, kz = jax.random.split(key, 3)
    d, N, M = 32, 256, 128
    X = jax.random.normal(kx, (d, N), dtype=jnp.float32)
    Y = jax.random.normal(ky, (d, M), dtype=jnp.float32)

    # Cross kernel.
    K = jax.block_until_ready(laplace_kernel_matrix(X, Y, sigma2=sigma2))
    assert K.shape == (N, M)
    assert jnp.allclose(K, _reference(X, Y, sigma2), atol=2e-3, rtol=2e-3), \
        "cross-kernel mismatch"

    # Non-multiple-of-128 M exercises the padding path.
    M2 = 96
    Y2 = jax.random.normal(kz, (d, M2), dtype=jnp.float32)
    K2 = jax.block_until_ready(laplace_kernel_matrix(X, Y2, sigma2=sigma2))
    assert K2.shape == (N, M2)
    assert jnp.allclose(K2, _reference(X, Y2, sigma2), atol=2e-3, rtol=2e-3), \
        "padded cross-kernel mismatch"

    # Self kernel (Y=None). Looser tolerance: on the diagonal d2 ~ 0 and sqrt()
    # amplifies benign rounding differences in x_sq + y_sq - 2*gram (the PyTorch
    # module has the same ill-conditioning); values are still O(1) so this check
    # remains meaningful.
    K_self = jax.block_until_ready(laplace_kernel_matrix(X, sigma2=sigma2))
    assert K_self.shape == (N, N)
    assert jnp.allclose(K_self, _reference(X, X, sigma2), atol=1e-2, rtol=1e-2), \
        "self-kernel mismatch"

    print("KERNEL_OK")
</pallas_src>

<mosaic_0001>
module attributes {stable_mosaic.version = 11 : i64} {
  func.func @_laplace_kernel_body(%arg0: i32, %arg1: i32, %arg2: memref<256x32xf32, #tpu.memory_space<vmem>>, %arg3: memref<128x32xf32, #tpu.memory_space<vmem>>, %arg4: memref<256x1xf32, #tpu.memory_space<vmem>>, %arg5: memref<1x128xf32, #tpu.memory_space<vmem>>, %arg6: memref<256x128xf32, #tpu.memory_space<vmem>>) attributes {dimension_semantics = [#tpu.dimension_semantics<parallel>, #tpu.dimension_semantics<parallel>], iteration_bounds = array<i64: 1, 1>, scalar_prefetch = 0 : i64, scratch_operands = 0 : i64, tpu.core_type = #tpu.core_type<tc>, window_params = [{transform_indices = @transform_0, window_bounds = array<i64: 256, 32>}, {transform_indices = @transform_1, window_bounds = array<i64: 128, 32>}, {transform_indices = @transform_2, window_bounds = array<i64: 256, 1>}, {transform_indices = @transform_3, window_bounds = array<i64: 1, 128>}, {transform_indices = @transform_4, window_bounds = array<i64: 256, 128>}]} {
    %c0 = arith.constant 0 : index
    %c0_0 = arith.constant 0 : index
    %0 = vector.load %arg2[%c0, %c0_0] : memref<256x32xf32, #tpu.memory_space<vmem>>, vector<256x32xf32>
    %c0_1 = arith.constant 0 : index
    %c0_2 = arith.constant 0 : index
    %1 = vector.load %arg3[%c0_1, %c0_2] : memref<128x32xf32, #tpu.memory_space<vmem>>, vector<128x32xf32>
    %cst = arith.constant dense<0.000000e+00> : vector<256x128xf32>
    %2 = tpu.matmul %0, %1, %cst {dimension_numbers = #tpu.dot_dimension_numbers<[1], [1], [0], [0], [0, 0, 1, 0], [], []>} : vector<256x32xf32>, vector<128x32xf32>, vector<256x128xf32> -> vector<256x128xf32>
    %c0_3 = arith.constant 0 : index
    %c0_4 = arith.constant 0 : index
    %3 = vector.load %arg4[%c0_3, %c0_4] : memref<256x1xf32, #tpu.memory_space<vmem>>, vector<256x1xf32>
    %c0_5 = arith.constant 0 : index
    %c0_6 = arith.constant 0 : index
    %4 = vector.load %arg5[%c0_5, %c0_6] : memref<1x128xf32, #tpu.memory_space<vmem>>, vector<1x128xf32>
    %5 = vector.broadcast %3 : vector<256x1xf32> to vector<256x128xf32>
    %6 = vector.broadcast %4 : vector<1x128xf32> to vector<256x128xf32>
    %7 = arith.addf %5, %6 : vector<256x128xf32>
    %cst_7 = arith.constant 2.000000e+00 : f32
    %8 = vector.broadcast %cst_7 : f32 to vector<256x128xf32>
    %9 = arith.mulf %8, %2 : vector<256x128xf32>
    %10 = arith.subf %7, %9 : vector<256x128xf32>
    %cst_8 = arith.constant 1.000000e-30 : f32
    %11 = vector.broadcast %cst_8 : f32 to vector<256x128xf32>
    %12 = arith.maximumf %10, %11 : vector<256x128xf32>
    %13 = math.sqrt %12 : vector<256x128xf32>
    %cst_9 = arith.constant -2.000000e-02 : f32
    %14 = vector.broadcast %cst_9 : f32 to vector<256x128xf32>
    %15 = arith.mulf %13, %14 : vector<256x128xf32>
    %16 = math.exp %15 : vector<256x128xf32>
    %c0_10 = arith.constant 0 : index
    %c0_11 = arith.constant 0 : index
    %17 = vector.load %arg6[%c0_10, %c0_11] : memref<256x128xf32, #tpu.memory_space<vmem>>, vector<256x128xf32>
    tpu.vector_store %arg6[%c0_10, %c0_11], %16 {strides = array<i32>} : memref<256x128xf32, #tpu.memory_space<vmem>>, vector<256x128xf32>,
    return
  }
  func.func @transform_0(%arg0: i32, %arg1: i32) -> (i32, i32) {
    %c0_i32 = arith.constant 0 : i32
    %c0_i32_0 = arith.constant 0 : i32
    return %arg0, %c0_i32 : i32, i32
  }
  func.func @transform_1(%arg0: i32, %arg1: i32) -> (i32, i32) {
    %c0_i32 = arith.constant 0 : i32
    %c0_i32_0 = arith.constant 0 : i32
    return %arg1, %c0_i32 : i32, i32
  }
  func.func @transform_2(%arg0: i32, %arg1: i32) -> (i32, i32) {
    %c0_i32 = arith.constant 0 : i32
    %c0_i32_0 = arith.constant 0 : i32
    return %arg0, %c0_i32 : i32, i32
  }
  func.func @transform_3(%arg0: i32, %arg1: i32) -> (i32, i32) {
    %c0_i32 = arith.constant 0 : i32
    %c0_i32_0 = arith.constant 0 : i32
    return %c0_i32, %arg1 : i32, i32
  }
  func.func @transform_4(%arg0: i32, %arg1: i32) -> (i32, i32) {
    %c0_i32 = arith.constant 0 : i32
    return %arg0, %arg1 : i32, i32
  }
}

</mosaic_0001>

<llo_original>
// kernel: tpu_custom_call.1
$region0: #{tpu_custom_call.1}
  #allocation0 [shape = 'u32[]', space=smem, size = 0x4, offset = 0x4, fixed_abs, tag = 'smem constant byte address 0x4 - core index']
  #allocation1 [shape = 'u32[144,128]{1,0:T(1,128)}', space=vmem, size = 0x12000, scoped, tag = 'internal scratch']
  %s0 = inlined_call_operand.vmem [shape: f32[256,32], index: 0, kind: input, shape index: {}]
  %s1 = inlined_call_operand.vmem [shape: f32[128,32], index: 1, kind: input, shape index: {}]
  %s2 = inlined_call_operand.vmem [shape: f32[256,1], index: 2, kind: input, shape index: {}]
  %s3 = inlined_call_operand.vmem [shape: f32[1,128], index: 3, kind: input, shape index: {}]
  %s4 = inlined_call_operand.hbm [shape: f32[256,128], index: 4, kind: output, shape index: {}]
  %s5 = sld [smem:[#allocation0]]
  $region26: #{tpu_custom_call.1} parent=0
    _
  %s7 = ssub.s32 1, %s5
  %s8 = scalar_select 0, %s7, %s5
  $region1: #{tpu_custom_call.1} parent=0
    #allocation2 [shape = 'u8[131072]{0}', space=vmem, size = 0x20000, scoped, tag = 'output window, operand 0, single buffered']
    #allocation3 [shape = 's32[1]{0}', space=sflag, size = 0x4, scoped, tag = 'scoped memory for tpu_custom_call.1']
    %9 = vsyncpa [#allocation3], 0
    // Predicated region
    $region2: #{tpu_custom_call.1} parent=1 // pred_check
      _
    $region3: #{tpu_custom_call.1} parent=1 // pred_check_branch
      %11 = sbr.rel (0) target = $region5
    $region4: #{tpu_custom_call.1} parent=1 // pred_region
      _
    $region5: #{tpu_custom_call.1} parent=1 // pred_fallthru
      _
    // Predicated region
    $region6: #{tpu_custom_call.1} parent=1 // pred_check
      _
    $region7: #{tpu_custom_call.1} parent=1 // pred_check_branch
      %13 = sbr.rel (0) target = $region9
    $region8: #{tpu_custom_call.1} parent=1 // pred_region
      _
    $region9: #{tpu_custom_call.1} parent=1 // pred_fallthru
      _
    // Predicated region
    $region10: #{tpu_custom_call.1} parent=1 // pred_check
      _
    $region11: #{tpu_custom_call.1} parent=1 // pred_check_branch
      %15 = sbr.rel (0) target = $region13
    $region12: #{tpu_custom_call.1} parent=1 // pred_region
      _
    $region13: #{tpu_custom_call.1} parent=1 // pred_fallthru
      _
    // Predicated region
    $region14: #{tpu_custom_call.1} parent=1 // pred_check
      _
    $region15: #{tpu_custom_call.1} parent=1 // pred_check_branch
      %17 = sbr.rel (0) target = $region17
    $region16: #{tpu_custom_call.1} parent=1 // pred_region
      _
    $region17: #{tpu_custom_call.1} parent=1 // pred_fallthru
      _
    %v18 = vld [vmem:[%s0] sm:$0xff]
    %v19 = vld [vmem:[%s0 + $0x8] sm:$0xff]
    %v20 = vld [vmem:[%s0 + $0x10] sm:$0xff]
    %v21 = vld [vmem:[%s0 + $0x18] sm:$0xff]
    %v22 = vld [vmem:[%s0 + $0x20] sm:$0xff]
    %v23 = vld [vmem:[%s0 + $0x28] sm:$0xff]
    %v24 = vld [vmem:[%s0 + $0x30] sm:$0xff]
    %v25 = vld [vmem:[%s0 + $0x38] sm:$0xff]
    %v26 = vld [vmem:[%s0 + $0x40] sm:$0xff]
    %v27 = vld [vmem:[%s0 + $0x48] sm:$0xff]
    %v28 = vld [vmem:[%s0 + $0x50] sm:$0xff]
    %v29 = vld [vmem:[%s0 + $0x58] sm:$0xff]
    %v30 = vld [vmem:[%s0 + $0x60] sm:$0xff]
    %v31 = vld [vmem:[%s0 + $0x68] sm:$0xff]
    %v32 = vld [vmem:[%s0 + $0x70] sm:$0xff]
    %v33 = vld [vmem:[%s0 + $0x78] sm:$0xff]
    %v34 = vld [vmem:[%s0 + $0x80] sm:$0xff]
    %v35 = vld [vmem:[%s0 + $0x88] sm:$0xff]
    %v36 = vld [vmem:[%s0 + $0x90] sm:$0xff]
    %v37 = vld [vmem:[%s0 + $0x98] sm:$0xff]
    %v38 = vld [vmem:[%s0 + $0xa0] sm:$0xff]
    %v39 = vld [vmem:[%s0 + $0xa8] sm:$0xff]
    %v40 = vld [vmem:[%s0 + $0xb0] sm:$0xff]
    %v41 = vld [vmem:[%s0 + $0xb8] sm:$0xff]
    %v42 = vld [vmem:[%s0 + $0xc0] sm:$0xff]
    %v43 = vld [vmem:[%s0 + $0xc8] sm:$0xff]
    %v44 = vld [vmem:[%s0 + $0xd0] sm:$0xff]
    %v45 = vld [vmem:[%s0 + $0xd8] sm:$0xff]
    %v46 = vld [vmem:[%s0 + $0xe0] sm:$0xff]
    %v47 = vld [vmem:[%s0 + $0xe8] sm:$0xff]
    %v48 = vld [vmem:[%s0 + $0xf0] sm:$0xff]
    %v49 = vld [vmem:[%s0 + $0xf8] sm:$0xff]
    %v50 = vld [vmem:[%s1] sm:$0xff]
    %v51 = vld [vmem:[%s1 + $0x8] sm:$0xff]
    %v52 = vld [vmem:[%s1 + $0x10] sm:$0xff]
    %v53 = vld [vmem:[%s1 + $0x18] sm:$0xff]
    %v54 = vld [vmem:[%s1 + $0x20] sm:$0xff]
    %v55 = vld [vmem:[%s1 + $0x28] sm:$0xff]
    %v56 = vld [vmem:[%s1 + $0x30] sm:$0xff]
    %v57 = vld [vmem:[%s1 + $0x38] sm:$0xff]
    %v58 = vld [vmem:[%s1 + $0x40] sm:$0xff]
    %v59 = vld [vmem:[%s1 + $0x48] sm:$0xff]
    %v60 = vld [vmem:[%s1 + $0x50] sm:$0xff]
    %v61 = vld [vmem:[%s1 + $0x58] sm:$0xff]
    %v62 = vld [vmem:[%s1 + $0x60] sm:$0xff]
    %v63 = vld [vmem:[%s1 + $0x68] sm:$0xff]
    %v64 = vld [vmem:[%s1 + $0x70] sm:$0xff]
    %v65 = vld [vmem:[%s1 + $0x78] sm:$0xff]
    %vm66 = vcmask 261120
    %v68 = vsel %vm66, %v18, 0
    %v71 = vsel %vm66, %v19, 0
    %v74 = vsel %vm66, %v20, 0
    %v77 = vsel %vm66, %v21, 0
    %v80 = vsel %vm66, %v22, 0
    %v83 = vsel %vm66, %v23, 0
    %v86 = vsel %vm66, %v24, 0
    %v89 = vsel %vm66, %v25, 0
    %v92 = vsel %vm66, %v26, 0
    %v95 = vsel %vm66, %v27, 0
    %v98 = vsel %vm66, %v28, 0
    %v101 = vsel %vm66, %v29, 0
    %v104 = vsel %vm66, %v30, 0
    %v107 = vsel %vm66, %v31, 0
    %v110 = vsel %vm66, %v32, 0
    %v113 = vsel %vm66, %v33, 0
    %v116 = vsel %vm66, %v34, 0
    %v119 = vsel %vm66, %v35, 0
    %v122 = vsel %vm66, %v36, 0
    %v125 = vsel %vm66, %v37, 0
    %v128 = vsel %vm66, %v38, 0
    %v131 = vsel %vm66, %v39, 0
    %v134 = vsel %vm66, %v40, 0
    %v137 = vsel %vm66, %v41, 0
    %v140 = vsel %vm66, %v42, 0
    %v143 = vsel %vm66, %v43, 0
    %v146 = vsel %vm66, %v44, 0
    %v149 = vsel %vm66, %v45, 0
    %v152 = vsel %vm66, %v46, 0
    %v155 = vsel %vm66, %v47, 0
    %v158 = vsel %vm66, %v48, 0
    %v161 = vsel %vm66, %v49, 0
    %v164 = vsel %vm66, %v50, 0
    %v167 = vsel %vm66, %v51, 0
    %v170 = vsel %vm66, %v52, 0
    %v173 = vsel %vm66, %v53, 0
    %v176 = vsel %vm66, %v54, 0
    %v179 = vsel %vm66, %v55, 0
    %v182 = vsel %vm66, %v56, 0
    %v185 = vsel %vm66, %v57, 0
    %v188 = vsel %vm66, %v58, 0
    %v191 = vsel %vm66, %v59, 0
    %v194 = vsel %vm66, %v60, 0
    %v197 = vsel %vm66, %v61, 0
    %v200 = vsel %vm66, %v62, 0
    %v203 = vsel %vm66, %v63, 0
    %v206 = vsel %vm66, %v64, 0
    %v209 = vsel %vm66, %v65, 0
    %211 = vmatprep.subr.mxu0 0.0
    %212 = vmatpush1.xpose.msra.mxu0 %v164
    %213 = vmatprep.subr.mxu0 0.0
    %214 = vmatpush1.xpose.msra.mxu0 %v167
    %215 = vmatprep.subr.mxu0 0.0
    %216 = vmatpush1.xpose.msra.mxu0 %v170
    %217 = vmatprep.subr.mxu0 0.0
    %218 = vmatpush1.xpose.msra.mxu0 %v173
    %219 = vmatprep.subr.mxu0 0.0
    %220 = vmatpush1.xpose.msra.mxu0 %v176
    %221 = vmatprep.subr.mxu0 0.0
    %222 = vmatpush1.xpose.msra.mxu0 %v179
    %223 = vmatprep.subr.mxu0 0.0
    %224 = vmatpush1.xpose.msra.mxu0 %v182
    %225 = vmatprep.subr.mxu0 0.0
    %226 = vmatpush1.xpose.msra.mxu0 %v185
    %227 = vmatprep.subr.mxu0 0.0
    %228 = vmatpush1.xpose.msra.mxu0 %v188
    %229 = vmatprep.subr.mxu0 0.0
    %230 = vmatpush1.xpose.msra.mxu0 %v191
    %231 = vmatprep.subr.mxu0 0.0
    %232 = vmatpush1.xpose.msra.mxu0 %v194
    %233 = vmatprep.subr.mxu0 0.0
    %234 = vmatpush1.xpose.msra.mxu0 %v197
    %235 = vmatprep.subr.mxu0 0.0
    %236 = vmatpush1.xpose.msra.mxu0 %v200
    %237 = vmatprep.subr.mxu0 0.0
    %238 = vmatpush1.xpose.msra.mxu0 %v203
    %239 = vmatprep.subr.mxu0 0.0
    %240 = vmatpush1.xpose.msra.mxu0 %v206
    %241 = vmatprep.subr.mxu0 0.0
    %242 = vmatpush1.xpose.msra.mxu0 %v209
    %243 = vmatprep.subr.mxu0 0.0
    %244 = vmatpush1.xpose.msra.mxu0 0.0
    %245 = vmatprep.subr.mxu0 0.0
    %246 = vmatpush1.xpose.msra.mxu0 0.0
    %247 = vmatprep.subr.mxu0 0.0
    %248 = vmatpush1.xpose.msra.mxu0 0.0
    %249 = vmatprep.subr.mxu0 0.0
    %250 = vmatpush1.xpose.msra.mxu0 0.0
    %251 = vmatprep.subr.mxu0 0.0
    %252 = vmatpush1.xpose.msra.mxu0 0.0
    %253 = vmatprep.subr.mxu0 0.0
    %254 = vmatpush1.xpose.msra.mxu0 0.0
    %255 = vmatprep.subr.mxu0 0.0
    %256 = vmatpush1.xpose.msra.mxu0 0.0
    %257 = vmatprep.subr.mxu0 0.0
    %258 = vmatpush1.xpose.msra.mxu0 0.0
    %259 = vmatprep.subr.mxu0 0.0
    %260 = vmatpush1.xpose.msra.mxu0 0.0
    %261 = vmatprep.subr.mxu0 0.0
    %262 = vmatpush1.xpose.msra.mxu0 0.0
    %263 = vmatprep.subr.mxu0 0.0
    %264 = vmatpush1.xpose.msra.mxu0 0.0
    %265 = vmatprep.subr.mxu0 0.0
    %266 = vmatpush1.xpose.msra.mxu0 0.0
    %267 = vmatprep.subr.mxu0 0.0
    %268 = vmatpush1.xpose.msra.mxu0 0.0
    %269 = vmatprep.subr.mxu0 0.0
    %270 = vmatpush1.xpose.msra.mxu0 0.0
    %271 = vmatprep.subr.mxu0 0.0
    %272 = vmatpush1.xpose.msra.mxu0 0.0
    %273 = vmatprep.subr.mxu0 0.0
    %274 = vmatpush1.xpose.msra.mxu0 0.0
    %275 = vmatprep.mubr.f32.mxu0 0.0
    %276 = vmatmul.mubr.f32.gmra.mrb[0].mxu0 %v68
    %v277 = vpop.f32.mrb[0].mxu0
    %v278 = vadd.f32 0.0, %v277
    %v279 = vpop.f32.mrb[0].mxu0
    %280 = vmatprep.mubr.f32.mxu0 0.0
    %281 = vmatmul.mubr.f32.gmra.mrb[0].mxu0 %v71
    %v282 = vpop.f32.mrb[0].mxu0
    %v283 = vadd.f32 0.0, %v282
    %v284 = vpop.f32.mrb[0].mxu0
    %285 = vmatprep.mubr.f32.mxu0 0.0
    %286 = vmatmul.mubr.f32.gmra.mrb[0].mxu0 %v74
    %v287 = vpop.f32.mrb[0].mxu0
    %v288 = vadd.f32 0.0, %v287
    %v289 = vpop.f32.mrb[0].mxu0
    %290 = vmatprep.mubr.f32.mxu0 0.0
    %291 = vmatmul.mubr.f32.gmra.mrb[0].mxu0 %v77
    %v292 = vpop.f32.mrb[0].mxu0
    %v293 = vadd.f32 0.0, %v292
    %v294 = vpop.f32.mrb[0].mxu0
    %295 = vmatprep.mubr.f32.mxu0 0.0
    %296 = vmatmul.mubr.f32.gmra.mrb[0].mxu0 %v80
    %v297 = vpop.f32.mrb[0].mxu0
    %v298 = vadd.f32 0.0, %v297
    %v299 = vpop.f32.mrb[0].mxu0
    %300 = vmatprep.mubr.f32.mxu0 0.0
    %301 = vmatmul.mubr.f32.gmra.mrb[0].mxu0 %v83
    %v302 = vpop.f32.mrb[0].mxu0
    %v303 = vadd.f32 0.0, %v302
    %v304 = vpop.f32.mrb[0].mxu0
    %305 = vmatprep.mubr.f32.mxu0 0.0
    %306 = vmatmul.mubr.f32.gmra.mrb[0].mxu0 %v86
    %v307 = vpop.f32.mrb[0].mxu0
    %v308 = vadd.f32 0.0, %v307
    %v309 = vpop.f32.mrb[0].mxu0
    %310 = vmatprep.mubr.f32.mxu0 0.0
    %311 = vmatmul.mubr.f32.gmra.mrb[0].mxu0 %v89
    %v312 = vpop.f32.mrb[0].mxu0
    %v313 = vadd.f32 0.0, %v312
    %v314 = vpop.f32.mrb[0].mxu0
    %315 = vmatprep.mubr.f32.mxu0 0.0
    %316 = vmatmul.mubr.f32.gmra.mrb[0].mxu0 %v92
    %v317 = vpop.f32.mrb[0].mxu0
    %v318 = vadd.f32 0.0, %v317
    %v319 = vpop.f32.mrb[0].mxu0
    %320 = vmatprep.mubr.f32.mxu0 0.0
    %321 = vmatmul.mubr.f32.gmra.mrb[0].mxu0 %v95
    %v322 = vpop.f32.mrb[0].mxu0
    %v323 = vadd.f32 0.0, %v322
    %v324 = vpop.f32.mrb[0].mxu0
    %325 = vmatprep.mubr.f32.mxu0 0.0
    %326 = vmatmul.mubr.f32.gmra.mrb[0].mxu0 %v98
    %v327 = vpop.f32.mrb[0].mxu0
    %v328 = vadd.f32 0.0, %v327
    %v329 = vpop.f32.mrb[0].mxu0
    %330 = vmatprep.mubr.f32.mxu0 0.0
    %331 = vmatmul.mubr.f32.gmra.mrb[0].mxu0 %v101
    %v332 = vpop.f32.mrb[0].mxu0
    %v333 = vadd.f32 0.0, %v332
    %v334 = vpop.f32.mrb[0].mxu0
    %335 = vmatprep.mubr.f32.mxu0 0.0
    %336 = vmatmul.mubr.f32.gmra.mrb[0].mxu0 %v104
    %v337 = vpop.f32.mrb[0].mxu0
    %v338 = vadd.f32 0.0, %v337
    %v339 = vpop.f32.mrb[0].mxu0
    %340 = vmatprep.mubr.f32.mxu0 0.0
    %341 = vmatmul.mubr.f32.gmra.mrb[0].mxu0 %v107
    %v342 = vpop.f32.mrb[0].mxu0
    %v343 = vadd.f32 0.0, %v342
    %v344 = vpop.f32.mrb[0].mxu0
    %345 = vmatprep.mubr.f32.mxu0 0.0
    %346 = vmatmul.mubr.f32.gmra.mrb[0].mxu0 %v110
    %v347 = vpop.f32.mrb[0].mxu0
    %v348 = vadd.f32 0.0, %v347
    %v349 = vpop.f32.mrb[0].mxu0
    %350 = vmatprep.mubr.f32.mxu0 0.0
    %351 = vmatmul.mubr.f32.gmra.mrb[0].mxu0 %v113
    %v352 = vpop.f32.mrb[0].mxu0
    %v353 = vadd.f32 0.0, %v352
    %v354 = vpop.f32.mrb[0].mxu0
    %355 = vmatprep.mubr.f32.mxu0 0.0
    %356 = vmatmul.mubr.f32.gmra.mrb[0].mxu0 %v116
    %v357 = vpop.f32.mrb[0].mxu0
    %v358 = vadd.f32 0.0, %v357
    %v359 = vpop.f32.mrb[0].mxu0
    %360 = vmatprep.mubr.f32.mxu0 0.0
    %361 = vmatmul.mubr.f32.gmra.mrb[0].mxu0 %v119
    %v362 = vpop.f32.mrb[0].mxu0
    %v363 = vadd.f32 0.0, %v362
    %v364 = vpop.f32.mrb[0].mxu0
    %365 = vmatprep.mubr.f32.mxu0 0.0
    %366 = vmatmul.mubr.f32.gmra.mrb[0].mxu0 %v122
    %v367 = vpop.f32.mrb[0].mxu0
    %v368 = vadd.f32 0.0, %v367
    %v369 = vpop.f32.mrb[0].mxu0
    %370 = vmatprep.mubr.f32.mxu0 0.0
    %371 = vmatmul.mubr.f32.gmra.mrb[0].mxu0 %v125
    %v372 = vpop.f32.mrb[0].mxu0
    %v373 = vadd.f32 0.0, %v372
    %v374 = vpop.f32.mrb[0].mxu0
    %375 = vmatprep.mubr.f32.mxu0 0.0
    %376 = vmatmul.mubr.f32.gmra.mrb[0].mxu0 %v128
    %v377 = vpop.f32.mrb[0].mxu0
    %v378 = vadd.f32 0.0, %v377
    %v379 = vpop.f32.mrb[0].mxu0
    %380 = vmatprep.mubr.f32.mxu0 0.0
    %381 = vmatmul.mubr.f32.gmra.mrb[0].mxu0 %v131
    %v382 = vpop.f32.mrb[0].mxu0
    %v383 = vadd.f32 0.0, %v382
    %v384 = vpop.f32.mrb[0].mxu0
    %385 = vmatprep.mubr.f32.mxu0 0.0
    %386 = vmatmul.mubr.f32.gmra.mrb[0].mxu0 %v134
    %v387 = vpop.f32.mrb[0].mxu0
    %v388 = vadd.f32 0.0, %v387
    %v389 = vpop.f32.mrb[0].mxu0
    %390 = vmatprep.mubr.f32.mxu0 0.0
    %391 = vmatmul.mubr.f32.gmra.mrb[0].mxu0 %v137
    %v392 = vpop.f32.mrb[0].mxu0
    %v393 = vadd.f32 0.0, %v392
    %v394 = vpop.f32.mrb[0].mxu0
    %395 = vmatprep.mubr.f32.mxu0 0.0
    %396 = vmatmul.mubr.f32.gmra.mrb[0].mxu0 %v140
    %v397 = vpop.f32.mrb[0].mxu0
    %v398 = vadd.f32 0.0, %v397
    %v399 = vpop.f32.mrb[0].mxu0
    %400 = vmatprep.mubr.f32.mxu0 0.0
    %401 = vmatmul.mubr.f32.gmra.mrb[0].mxu0 %v143
    %v402 = vpop.f32.mrb[0].mxu0
    %v403 = vadd.f32 0.0, %v402
    %v404 = vpop.f32.mrb[0].mxu0
    %405 = vmatprep.mubr.f32.mxu0 0.0
    %406 = vmatmul.mubr.f32.gmra.mrb[0].mxu0 %v146
    %v407 = vpop.f32.mrb[0].mxu0
    %v408 = vadd.f32 0.0, %v407
    %v409 = vpop.f32.mrb[0].mxu0
    %410 = vmatprep.mubr.f32.mxu0 0.0
    %411 = vmatmul.mubr.f32.gmra.mrb[0].mxu0 %v149
    %v412 = vpop.f32.mrb[0].mxu0
    %v413 = vadd.f32 0.0, %v412
    %v414 = vpop.f32.mrb[0].mxu0
    %415 = vmatprep.mubr.f32.mxu0 0.0
    %416 = vmatmul.mubr.f32.gmra.mrb[0].mxu0 %v152
    %v417 = vpop.f32.mrb[0].mxu0
    %v418 = vadd.f32 0.0, %v417
    %v419 = vpop.f32.mrb[0].mxu0
    %420 = vmatprep.mubr.f32.mxu0 0.0
    %421 = vmatmul.mubr.f32.gmra.mrb[0].mxu0 %v155
    %v422 = vpop.f32.mrb[0].mxu0
    %v423 = vadd.f32 0.0, %v422
    %v424 = vpop.f32.mrb[0].mxu0
    %425 = vmatprep.mubr.f32.mxu0 0.0
    %426 = vmatmul.mubr.f32.gmra.mrb[0].mxu0 %v158
    %v427 = vpop.f32.mrb[0].mxu0
    %v428 = vadd.f32 0.0, %v427
    %v429 = vpop.f32.mrb[0].mxu0
    %430 = vmatprep.mubr.f32.mxu0 0.0
    %431 = vmatmul.mubr.f32.gmra.mrb[0].mxu0 %v161
    %v432 = vpop.f32.mrb[0].mxu0
    %v433 = vadd.f32 0.0, %v432
    %v434 = vpop.f32.mrb[0].mxu0
    %435 = vdwg.mxu0
    %v436 = vld [vmem:[%s2] sm:$0xff]
    %v437 = vld [vmem:[%s2 + $0x8] sm:$0xff]
    %v438 = vld [vmem:[%s2 + $0x10] sm:$0xff]
    %v439 = vld [vmem:[%s2 + $0x18] sm:$0xff]
    %v440 = vld [vmem:[%s2 + $0x20] sm:$0xff]
    %v441 = vld [vmem:[%s2 + $0x28] sm:$0xff]
    %v442 = vld [vmem:[%s2 + $0x30] sm:$0xff]
    %v443 = vld [vmem:[%s2 + $0x38] sm:$0xff]
    %v444 = vld [vmem:[%s2 + $0x40] sm:$0xff]
    %v445 = vld [vmem:[%s2 + $0x48] sm:$0xff]
    %v446 = vld [vmem:[%s2 + $0x50] sm:$0xff]
    %v447 = vld [vmem:[%s2 + $0x58] sm:$0xff]
    %v448 = vld [vmem:[%s2 + $0x60] sm:$0xff]
    %v449 = vld [vmem:[%s2 + $0x68] sm:$0xff]
    %v450 = vld [vmem:[%s2 + $0x70] sm:$0xff]
    %v451 = vld [vmem:[%s2 + $0x78] sm:$0xff]
    %v452 = vld [vmem:[%s2 + $0x80] sm:$0xff]
    %v453 = vld [vmem:[%s2 + $0x88] sm:$0xff]
    %v454 = vld [vmem:[%s2 + $0x90] sm:$0xff]
    %v455 = vld [vmem:[%s2 + $0x98] sm:$0xff]
    %v456 = vld [vmem:[%s2 + $0xa0] sm:$0xff]
    %v457 = vld [vmem:[%s2 + $0xa8] sm:$0xff]
    %v458 = vld [vmem:[%s2 + $0xb0] sm:$0xff]
    %v459 = vld [vmem:[%s2 + $0xb8] sm:$0xff]
    %v460 = vld [vmem:[%s2 + $0xc0] sm:$0xff]
    %v461 = vld [vmem:[%s2 + $0xc8] sm:$0xff]
    %v462 = vld [vmem:[%s2 + $0xd0] sm:$0xff]
    %v463 = vld [vmem:[%s2 + $0xd8] sm:$0xff]
    %v464 = vld [vmem:[%s2 + $0xe0] sm:$0xff]
    %v465 = vld [vmem:[%s2 + $0xe8] sm:$0xff]
    %v466 = vld [vmem:[%s2 + $0xf0] sm:$0xff]
    %v467 = vld [vmem:[%s2 + $0xf8] sm:$0xff]
    %v468 = vld [vmem:[%s3] sm:$0x1]
    %470 = vset.pattern.permute.xlu0 0
    %471 = vperm.xlu0 %470, %v436
    %v472 = vpop.permute.xlu0 %471
    %475 = vset.pattern.permute.xlu0 0
    %476 = vperm.xlu0 %475, %v437
    %v477 = vpop.permute.xlu0 %476
    %480 = vset.pattern.permute.xlu0 0
    %481 = vperm.xlu0 %480, %v438
    %v482 = vpop.permute.xlu0 %481
    %485 = vset.pattern.permute.xlu0 0
    %486 = vperm.xlu0 %485, %v439
    %v487 = vpop.permute.xlu0 %486
    %490 = vset.pattern.permute.xlu0 0
    %491 = vperm.xlu0 %490, %v440
    %v492 = vpop.permute.xlu0 %491
    %495 = vset.pattern.permute.xlu0 0
    %496 = vperm.xlu0 %495, %v441
    %v497 = vpop.permute.xlu0 %496
    %500 = vset.pattern.permute.xlu0 0
    %501 = vperm.xlu0 %500, %v442
    %v502 = vpop.permute.xlu0 %501
    %505 = vset.pattern.permute.xlu0 0
    %506 = vperm.xlu0 %505, %v443
    %v507 = vpop.permute.xlu0 %506
    %510 = vset.pattern.permute.xlu0 0
    %511 = vperm.xlu0 %510, %v444
    %v512 = vpop.permute.xlu0 %511
    %515 = vset.pattern.permute.xlu0 0
    %516 = vperm.xlu0 %515, %v445
    %v517 = vpop.permute.xlu0 %516
    %520 = vset.pattern.permute.xlu0 0
    %521 = vperm.xlu0 %520, %v446
    %v522 = vpop.permute.xlu0 %521
    %525 = vset.pattern.permute.xlu0 0
    %526 = vperm.xlu0 %525, %v447
    %v527 = vpop.permute.xlu0 %526
    %530 = vset.pattern.permute.xlu0 0
    %531 = vperm.xlu0 %530, %v448
    %v532 = vpop.permute.xlu0 %531
    %535 = vset.pattern.permute.xlu0 0
    %536 = vperm.xlu0 %535, %v449
    %v537 = vpop.permute.xlu0 %536
    %540 = vset.pattern.permute.xlu0 0
    %541 = vperm.xlu0 %540, %v450
    %v542 = vpop.permute.xlu0 %541
    %545 = vset.pattern.permute.xlu0 0
    %546 = vperm.xlu0 %545, %v451
    %v547 = vpop.permute.xlu0 %546
    %550 = vset.pattern.permute.xlu0 0
    %551 = vperm.xlu0 %550, %v452
    %v552 = vpop.permute.xlu0 %551
    %555 = vset.pattern.permute.xlu0 0
    %556 = vperm.xlu0 %555, %v453
    %v557 = vpop.permute.xlu0 %556
    %560 = vset.pattern.permute.xlu0 0
    %561 = vperm.xlu0 %560, %v454
    %v562 = vpop.permute.xlu0 %561
    %565 = vset.pattern.permute.xlu0 0
    %566 = vperm.xlu0 %565, %v455
    %v567 = vpop.permute.xlu0 %566
    %570 = vset.pattern.permute.xlu0 0
    %571 = vperm.xlu0 %570, %v456
    %v572 = vpop.permute.xlu0 %571
    %575 = vset.pattern.permute.xlu0 0
    %576 = vperm.xlu0 %575, %v457
    %v577 = vpop.permute.xlu0 %576
    %580 = vset.pattern.permute.xlu0 0
    %581 = vperm.xlu0 %580, %v458
    %v582 = vpop.permute.xlu0 %581
    %585 = vset.pattern.permute.xlu0 0
    %586 = vperm.xlu0 %585, %v459
    %v587 = vpop.permute.xlu0 %586
    %590 = vset.pattern.permute.xlu0 0
    %591 = vperm.xlu0 %590, %v460
    %v592 = vpop.permute.xlu0 %591
    %595 = vset.pattern.permute.xlu0 0
    %596 = vperm.xlu0 %595, %v461
    %v597 = vpop.permute.xlu0 %596
    %600 = vset.pattern.permute.xlu0 0
    %601 = vperm.xlu0 %600, %v462
    %v602 = vpop.permute.xlu0 %601
    %605 = vset.pattern.permute.xlu0 0
    %606 = vperm.xlu0 %605, %v463
    %v607 = vpop.permute.xlu0 %606
    %610 = vset.pattern.permute.xlu0 0
    %611 = vperm.xlu0 %610, %v464
    %v612 = vpop.permute.xlu0 %611
    %615 = vset.pattern.permute.xlu0 0
    %616 = vperm.xlu0 %615, %v465
    %v617 = vpop.permute.xlu0 %616
    %620 = vset.pattern.permute.xlu0 0
    %621 = vperm.xlu0 %620, %v466
    %v622 = vpop.permute.xlu0 %621
    %625 = vset.pattern.permute.xlu0 0
    %626 = vperm.xlu0 %625, %v467
    %v627 = vpop.permute.xlu0 %626
    %v630 = vlaneseq
    %v631 = vshrl.u32 %v630, 7
    %v632 = vsub.s32 0, %v631
    %v633 = vrot.slane %v468, %v632
    %v635 = vadd.f32 %v472, %v633
    %v636 = vadd.f32 %v477, %v633
    %v637 = vadd.f32 %v482, %v633
    %v638 = vadd.f32 %v487, %v633
    %v639 = vadd.f32 %v492, %v633
    %v640 = vadd.f32 %v497, %v633
    %v641 = vadd.f32 %v502, %v633
    %v642 = vadd.f32 %v507, %v633
    %v643 = vadd.f32 %v512, %v633
    %v644 = vadd.f32 %v517, %v633
    %v645 = vadd.f32 %v522, %v633
    %v646 = vadd.f32 %v527, %v633
    %v647 = vadd.f32 %v532, %v633
    %v648 = vadd.f32 %v537, %v633
    %v649 = vadd.f32 %v542, %v633
    %v650 = vadd.f32 %v547, %v633
    %v651 = vadd.f32 %v552, %v633
    %v652 = vadd.f32 %v557, %v633
    %v653 = vadd.f32 %v562, %v633
    %v654 = vadd.f32 %v567, %v633
    %v655 = vadd.f32 %v572, %v633
    %v656 = vadd.f32 %v577, %v633
    %v657 = vadd.f32 %v582, %v633
    %v658 = vadd.f32 %v587, %v633
    %v659 = vadd.f32 %v592, %v633
    %v660 = vadd.f32 %v597, %v633
    %v661 = vadd.f32 %v602, %v633
    %v662 = vadd.f32 %v607, %v633
    %v663 = vadd.f32 %v612, %v633
    %v664 = vadd.f32 %v617, %v633
    %v665 = vadd.f32 %v622, %v633
    %v666 = vadd.f32 %v627, %v633
    %v667 = vmul.f32 %v278, 2.0
    %v668 = vmul.f32 %v283, 2.0
    %v669 = vmul.f32 %v288, 2.0
    %v670 = vmul.f32 %v293, 2.0
    %v671 = vmul.f32 %v298, 2.0
    %v672 = vmul.f32 %v303, 2.0
    %v673 = vmul.f32 %v308, 2.0
    %v674 = vmul.f32 %v313, 2.0
    %v675 = vmul.f32 %v318, 2.0
    %v676 = vmul.f32 %v323, 2.0
    %v677 = vmul.f32 %v328, 2.0
    %v678 = vmul.f32 %v333, 2.0
    %v679 = vmul.f32 %v338, 2.0
    %v680 = vmul.f32 %v343, 2.0
    %v681 = vmul.f32 %v348, 2.0
    %v682 = vmul.f32 %v353, 2.0
    %v683 = vmul.f32 %v358, 2.0
    %v684 = vmul.f32 %v363, 2.0
    %v685 = vmul.f32 %v368, 2.0
    %v686 = vmul.f32 %v373, 2.0
    %v687 = vmul.f32 %v378, 2.0
    %v688 = vmul.f32 %v383, 2.0
    %v689 = vmul.f32 %v388, 2.0
    %v690 = vmul.f32 %v393, 2.0
    %v691 = vmul.f32 %v398, 2.0
    %v692 = vmul.f32 %v403, 2.0
    %v693 = vmul.f32 %v408, 2.0
    %v694 = vmul.f32 %v413, 2.0
    %v695 = vmul.f32 %v418, 2.0
    %v696 = vmul.f32 %v423, 2.0
    %v697 = vmul.f32 %v428, 2.0
    %v698 = vmul.f32 %v433, 2.0
    %v699 = vsub.f32 %v635, %v667
    %v700 = vsub.f32 %v636, %v668
    %v701 = vsub.f32 %v637, %v669
    %v702 = vsub.f32 %v638, %v670
    %v703 = vsub.f32 %v639, %v671
    %v704 = vsub.f32 %v640, %v672
    %v705 = vsub.f32 %v641, %v673
    %v706 = vsub.f32 %v642, %v674
    %v707 = vsub.f32 %v643, %v675
    %v708 = vsub.f32 %v644, %v676
    %v709 = vsub.f32 %v645, %v677
    %v710 = vsub.f32 %v646, %v678
    %v711 = vsub.f32 %v647, %v679
    %v712 = vsub.f32 %v648, %v680
    %v713 = vsub.f32 %v649, %v681
    %v714 = vsub.f32 %v650, %v682
    %v715 = vsub.f32 %v651, %v683
    %v716 = vsub.f32 %v652, %v684
    %v717 = vsub.f32 %v653, %v685
    %v718 = vsub.f32 %v654, %v686
    %v719 = vsub.f32 %v655, %v687
    %v720 = vsub.f32 %v656, %v688
    %v721 = vsub.f32 %v657, %v689
    %v722 = vsub.f32 %v658, %v690
    %v723 = vsub.f32 %v659, %v691
    %v724 = vsub.f32 %v660, %v692
    %v725 = vsub.f32 %v661, %v693
    %v726 = vsub.f32 %v662, %v694
    %v727 = vsub.f32 %v663, %v695
    %v728 = vsub.f32 %v664, %v696
    %v729 = vsub.f32 %v665, %v697
    %v730 = vsub.f32 %v666, %v698
    %v731 = vmax.f32 %v699, 1e-30
    %v732 = vmax.f32 %v700, 1e-30
    %v733 = vmax.f32 %v701, 1e-30
    %v734 = vmax.f32 %v702, 1e-30
    %v735 = vmax.f32 %v703, 1e-30
    %v736 = vmax.f32 %v704, 1e-30
    %v737 = vmax.f32 %v705, 1e-30
    %v738 = vmax.f32 %v706, 1e-30
    %v739 = vmax.f32 %v707, 1e-30
    %v740 = vmax.f32 %v708, 1e-30
    %v741 = vmax.f32 %v709, 1e-30
    %v742 = vmax.f32 %v710, 1e-30
    %v743 = vmax.f32 %v711, 1e-30
    %v744 = vmax.f32 %v712, 1e-30
    %v745 = vmax.f32 %v713, 1e-30
    %v746 = vmax.f32 %v714, 1e-30
    %v747 = vmax.f32 %v715, 1e-30
    %v748 = vmax.f32 %v716, 1e-30
    %v749 = vmax.f32 %v717, 1e-30
    %v750 = vmax.f32 %v718, 1e-30
    %v751 = vmax.f32 %v719, 1e-30
    %v752 = vmax.f32 %v720, 1e-30
    %v753 = vmax.f32 %v721, 1e-30
    %v754 = vmax.f32 %v722, 1e-30
    %v755 = vmax.f32 %v723, 1e-30
    %v756 = vmax.f32 %v724, 1e-30
    %v757 = vmax.f32 %v725, 1e-30
    %v758 = vmax.f32 %v726, 1e-30
    %v759 = vmax.f32 %v727, 1e-30
    %v760 = vmax.f32 %v728, 1e-30
    %v761 = vmax.f32 %v729, 1e-30
    %v762 = vmax.f32 %v730, 1e-30
    %v763 = vrsqrt.pop %v731
    %v764 = vmul.f32 %v731, %v763
    %vm765 = vcmp.eq.f32.partialorder %v731, inf
    %v766 = vsel %vm765, %v731, %v764
    %vm767 = vcmp.eq.f32.partialorder %v731, 0.0
    %v768 = vand.u32 %v731, 2147483648
    %v769 = vsel %vm767, %v768, %v766
    %v770 = vrsqrt.pop %v732
    %v771 = vmul.f32 %v732, %v770
    %vm772 = vcmp.eq.f32.partialorder %v732, inf
    %v773 = vsel %vm772, %v732, %v771
    %vm774 = vcmp.eq.f32.partialorder %v732, 0.0
    %v775 = vand.u32 %v732, 2147483648
    %v776 = vsel %vm774, %v775, %v773
    %v777 = vrsqrt.pop %v733
    %v778 = vmul.f32 %v733, %v777
    %vm779 = vcmp.eq.f32.partialorder %v733, inf
    %v780 = vsel %vm779, %v733, %v778
    %vm781 = vcmp.eq.f32.partialorder %v733, 0.0
    %v782 = vand.u32 %v733, 2147483648
    %v783 = vsel %vm781, %v782, %v780
    %v784 = vrsqrt.pop %v734
    %v785 = vmul.f32 %v734, %v784
    %vm786 = vcmp.eq.f32.partialorder %v734, inf
    %v787 = vsel %vm786, %v734, %v785
    %vm788 = vcmp.eq.f32.partialorder %v734, 0.0
    %v789 = vand.u32 %v734, 2147483648
    %v790 = vsel %vm788, %v789, %v787
    %v791 = vrsqrt.pop %v735
    %v792 = vmul.f32 %v735, %v791
    %vm793 = vcmp.eq.f32.partialorder %v735, inf
    %v794 = vsel %vm793, %v735, %v792
    %vm795 = vcmp.eq.f32.partialorder %v735, 0.0
    %v796 = vand.u32 %v735, 2147483648
    %v797 = vsel %vm795, %v796, %v794
    %v798 = vrsqrt.pop %v736
    %v799 = vmul.f32 %v736, %v798
    %vm800 = vcmp.eq.f32.partialorder %v736, inf
    %v801 = vsel %vm800, %v736, %v799
    %vm802 = vcmp.eq.f32.partialorder %v736, 0.0
    %v803 = vand.u32 %v736, 2147483648
    %v804 = vsel %vm802, %v803, %v801
    %v805 = vrsqrt.pop %v737
    %v806 = vmul.f32 %v737, %v805
    %vm807 = vcmp.eq.f32.partialorder %v737, inf
    %v808 = vsel %vm807, %v737, %v806
    %vm809 = vcmp.eq.f32.partialorder %v737, 0.0
    %v810 = vand.u32 %v737, 2147483648
    %v811 = vsel %vm809, %v810, %v808
    %v812 = vrsqrt.pop %v738
    %v813 = vmul.f32 %v738, %v812
    %vm814 = vcmp.eq.f32.partialorder %v738, inf
    %v815 = vsel %vm814, %v738, %v813
    %vm816 = vcmp.eq.f32.partialorder %v738, 0.0
    %v817 = vand.u32 %v738, 2147483648
    %v818 = vsel %vm816, %v817, %v815
    %v819 = vrsqrt.pop %v739
    %v820 = vmul.f32 %v739, %v819
    %vm821 = vcmp.eq.f32.partialorder %v739, inf
    %v822 = vsel %vm821, %v739, %v820
    %vm823 = vcmp.eq.f32.partialorder %v739, 0.0
    %v824 = vand.u32 %v739, 2147483648
    %v825 = vsel %vm823, %v824, %v822
    %v826 = vrsqrt.pop %v740
    %v827 = vmul.f32 %v740, %v826
    %vm828 = vcmp.eq.f32.partialorder %v740, inf
    %v829 = vsel %vm828, %v740, %v827
    %vm830 = vcmp.eq.f32.partialorder %v740, 0.0
    %v831 = vand.u32 %v740, 2147483648
    %v832 = vsel %vm830, %v831, %v829
    %v833 = vrsqrt.pop %v741
    %v834 = vmul.f32 %v741, %v833
    %vm835 = vcmp.eq.f32.partialorder %v741, inf
    %v836 = vsel %vm835, %v741, %v834
    %vm837 = vcmp.eq.f32.partialorder %v741, 0.0
    %v838 = vand.u32 %v741, 2147483648
    %v839 = vsel %vm837, %v838, %v836
    %v840 = vrsqrt.pop %v742
    %v841 = vmul.f32 %v742, %v840
    %vm842 = vcmp.eq.f32.partialorder %v742, inf
    %v843 = vsel %vm842, %v742, %v841
    %vm844 = vcmp.eq.f32.partialorder %v742, 0.0
    %v845 = vand.u32 %v742, 2147483648
    %v846 = vsel %vm844, %v845, %v843
    %v847 = vrsqrt.pop %v743
    %v848 = vmul.f32 %v743, %v847
    %vm849 = vcmp.eq.f32.partialorder %v743, inf
    %v850 = vsel %vm849, %v743, %v848
    %vm851 = vcmp.eq.f32.partialorder %v743, 0.0
    %v852 = vand.u32 %v743, 2147483648
    %v853 = vsel %vm851, %v852, %v850
    %v854 = vrsqrt.pop %v744
    %v855 = vmul.f32 %v744, %v854
    %vm856 = vcmp.eq.f32.partialorder %v744, inf
    %v857 = vsel %vm856, %v744, %v855
    %vm858 = vcmp.eq.f32.partialorder %v744, 0.0
    %v859 = vand.u32 %v744, 2147483648
    %v860 = vsel %vm858, %v859, %v857
    %v861 = vrsqrt.pop %v745
    %v862 = vmul.f32 %v745, %v861
    %vm863 = vcmp.eq.f32.partialorder %v745, inf
    %v864 = vsel %vm863, %v745, %v862
    %vm865 = vcmp.eq.f32.partialorder %v745, 0.0
    %v866 = vand.u32 %v745, 2147483648
    %v867 = vsel %vm865, %v866, %v864
    %v868 = vrsqrt.pop %v746
    %v869 = vmul.f32 %v746, %v868
    %vm870 = vcmp.eq.f32.partialorder %v746, inf
    %v871 = vsel %vm870, %v746, %v869
    %vm872 = vcmp.eq.f32.partialorder %v746, 0.0
    %v873 = vand.u32 %v746, 2147483648
    %v874 = vsel %vm872, %v873, %v871
    %v875 = vrsqrt.pop %v747
    %v876 = vmul.f32 %v747, %v875
    %vm877 = vcmp.eq.f32.partialorder %v747, inf
    %v878 = vsel %vm877, %v747, %v876
    %vm879 = vcmp.eq.f32.partialorder %v747, 0.0
    %v880 = vand.u32 %v747, 2147483648
    %v881 = vsel %vm879, %v880, %v878
    %v882 = vrsqrt.pop %v748
    %v883 = vmul.f32 %v748, %v882
    %vm884 = vcmp.eq.f32.partialorder %v748, inf
    %v885 = vsel %vm884, %v748, %v883
    %vm886 = vcmp.eq.f32.partialorder %v748, 0.0
    %v887 = vand.u32 %v748, 2147483648
    %v888 = vsel %vm886, %v887, %v885
    %v889 = vrsqrt.pop %v749
    %v890 = vmul.f32 %v749, %v889
    %vm891 = vcmp.eq.f32.partialorder %v749, inf
    %v892 = vsel %vm891, %v749, %v890
    %vm893 = vcmp.eq.f32.partialorder %v749, 0.0
    %v894 = vand.u32 %v749, 2147483648
    %v895 = vsel %vm893, %v894, %v892
    %v896 = vrsqrt.pop %v750
    %v897 = vmul.f32 %v750, %v896
    %vm898 = vcmp.eq.f32.partialorder %v750, inf
    %v899 = vsel %vm898, %v750, %v897
    %vm900 = vcmp.eq.f32.partialorder %v750, 0.0
    %v901 = vand.u32 %v750, 2147483648
    %v902 = vsel %vm900, %v901, %v899
    %v903 = vrsqrt.pop %v751
    %v904 = vmul.f32 %v751, %v903
    %vm905 = vcmp.eq.f32.partialorder %v751, inf
    %v906 = vsel %vm905, %v751, %v904
    %vm907 = vcmp.eq.f32.partialorder %v751, 0.0
    %v908 = vand.u32 %v751, 2147483648
    %v909 = vsel %vm907, %v908, %v906
    %v910 = vrsqrt.pop %v752
    %v911 = vmul.f32 %v752, %v910
    %vm912 = vcmp.eq.f32.partialorder %v752, inf
    %v913 = vsel %vm912, %v752, %v911
    %vm914 = vcmp.eq.f32.partialorder %v752, 0.0
    %v915 = vand.u32 %v752, 2147483648
    %v916 = vsel %vm914, %v915, %v913
    %v917 = vrsqrt.pop %v753
    %v918 = vmul.f32 %v753, %v917
    %vm919 = vcmp.eq.f32.partialorder %v753, inf
    %v920 = vsel %vm919, %v753, %v918
    %vm921 = vcmp.eq.f32.partialorder %v753, 0.0
    %v922 = vand.u32 %v753, 2147483648
    %v923 = vsel %vm921, %v922, %v920
    %v924 = vrsqrt.pop %v754
    %v925 = vmul.f32 %v754, %v924
    %vm926 = vcmp.eq.f32.partialorder %v754, inf
    %v927 = vsel %vm926, %v754, %v925
    %vm928 = vcmp.eq.f32.partialorder %v754, 0.0
    %v929 = vand.u32 %v754, 2147483648
    %v930 = vsel %vm928, %v929, %v927
    %v931 = vrsqrt.pop %v755
    %v932 = vmul.f32 %v755, %v931
    %vm933 = vcmp.eq.f32.partialorder %v755, inf
    %v934 = vsel %vm933, %v755, %v932
    %vm935 = vcmp.eq.f32.partialorder %v755, 0.0
    %v936 = vand.u32 %v755, 2147483648
    %v937 = vsel %vm935, %v936, %v934
    %v938 = vrsqrt.pop %v756
    %v939 = vmul.f32 %v756, %v938
    %vm940 = vcmp.eq.f32.partialorder %v756, inf
    %v941 = vsel %vm940, %v756, %v939
    %vm942 = vcmp.eq.f32.partialorder %v756, 0.0
    %v943 = vand.u32 %v756, 2147483648
    %v944 = vsel %vm942, %v943, %v941
    %v945 = vrsqrt.pop %v757
    %v946 = vmul.f32 %v757, %v945
    %vm947 = vcmp.eq.f32.partialorder %v757, inf
    %v948 = vsel %vm947, %v757, %v946
    %vm949 = vcmp.eq.f32.partialorder %v757, 0.0
    %v950 = vand.u32 %v757, 2147483648
    %v951 = vsel %vm949, %v950, %v948
    %v952 = vrsqrt.pop %v758
    %v953 = vmul.f32 %v758, %v952
    %vm954 = vcmp.eq.f32.partialorder %v758, inf
    %v955 = vsel %vm954, %v758, %v953
    %vm956 = vcmp.eq.f32.partialorder %v758, 0.0
    %v957 = vand.u32 %v758, 2147483648
    %v958 = vsel %vm956, %v957, %v955
    %v959 = vrsqrt.pop %v759
    %v960 = vmul.f32 %v759, %v959
    %vm961 = vcmp.eq.f32.partialorder %v759, inf
    %v962 = vsel %vm961, %v759, %v960
    %vm963 = vcmp.eq.f32.partialorder %v759, 0.0
    %v964 = vand.u32 %v759, 2147483648
    %v965 = vsel %vm963, %v964, %v962
    %v966 = vrsqrt.pop %v760
    %v967 = vmul.f32 %v760, %v966
    %vm968 = vcmp.eq.f32.partialorder %v760, inf
    %v969 = vsel %vm968, %v760, %v967
    %vm970 = vcmp.eq.f32.partialorder %v760, 0.0
    %v971 = vand.u32 %v760, 2147483648
    %v972 = vsel %vm970, %v971, %v969
    %v973 = vrsqrt.pop %v761
    %v974 = vmul.f32 %v761, %v973
    %vm975 = vcmp.eq.f32.partialorder %v761, inf
    %v976 = vsel %vm975, %v761, %v974
    %vm977 = vcmp.eq.f32.partialorder %v761, 0.0
    %v978 = vand.u32 %v761, 2147483648
    %v979 = vsel %vm977, %v978, %v976
    %v980 = vrsqrt.pop %v762
    %v981 = vmul.f32 %v762, %v980
    %vm982 = vcmp.eq.f32.partialorder %v762, inf
    %v983 = vsel %vm982, %v762, %v981
    %vm984 = vcmp.eq.f32.partialorder %v762, 0.0
    %v985 = vand.u32 %v762, 2147483648
    %v986 = vsel %vm984, %v985, %v983
    %v987 = vmul.f32 %v769, -0.02
    %v988 = vmul.f32 %v776, -0.02
    %v989 = vmul.f32 %v783, -0.02
    %v990 = vmul.f32 %v790, -0.02
    %v991 = vmul.f32 %v797, -0.02
    %v992 = vmul.f32 %v804, -0.02
    %v993 = vmul.f32 %v811, -0.02
    %v994 = vmul.f32 %v818, -0.02
    %v995 = vmul.f32 %v825, -0.02
    %v996 = vmul.f32 %v832, -0.02
    %v997 = vmul.f32 %v839, -0.02
    %v998 = vmul.f32 %v846, -0.02
    %v999 = vmul.f32 %v853, -0.02
    %v1000 = vmul.f32 %v860, -0.02
    %v1001 = vmul.f32 %v867, -0.02
    %v1002 = vmul.f32 %v874, -0.02
    %v1003 = vmul.f32 %v881, -0.02
    %v1004 = vmul.f32 %v888, -0.02
    %v1005 = vmul.f32 %v895, -0.02
    %v1006 = vmul.f32 %v902, -0.02
    %v1007 = vmul.f32 %v909, -0.02
    %v1008 = vmul.f32 %v916, -0.02
    %v1009 = vmul.f32 %v923, -0.02
    %v1010 = vmul.f32 %v930, -0.02
    %v1011 = vmul.f32 %v937, -0.02
    %v1012 = vmul.f32 %v944, -0.02
    %v1013 = vmul.f32 %v951, -0.02
    %v1014 = vmul.f32 %v958, -0.02
    %v1015 = vmul.f32 %v965, -0.02
    %v1016 = vmul.f32 %v972, -0.02
    %v1017 = vmul.f32 %v979, -0.02
    %v1018 = vmul.f32 %v986, -0.02
    %v1019 = vmul.f32 %v987, 1.442695
    %v1020 = vpow.pop %v1019
    %v1021 = vmul.f32 %v988, 1.442695
    %v1022 = vpow.pop %v1021
    %v1023 = vmul.f32 %v989, 1.442695
    %v1024 = vpow.pop %v1023
    %v1025 = vmul.f32 %v990, 1.442695
    %v1026 = vpow.pop %v1025
    %v1027 = vmul.f32 %v991, 1.442695
    %v1028 = vpow.pop %v1027
    %v1029 = vmul.f32 %v992, 1.442695
    %v1030 = vpow.pop %v1029
    %v1031 = vmul.f32 %v993, 1.442695
    %v1032 = vpow.pop %v1031
    %v1033 = vmul.f32 %v994, 1.442695
    %v1034 = vpow.pop %v1033
    %v1035 = vmul.f32 %v995, 1.442695
    %v1036 = vpow.pop %v1035
    %v1037 = vmul.f32 %v996, 1.442695
    %v1038 = vpow.pop %v1037
    %v1039 = vmul.f32 %v997, 1.442695
    %v1040 = vpow.pop %v1039
    %v1041 = vmul.f32 %v998, 1.442695
    %v1042 = vpow.pop %v1041
    %v1043 = vmul.f32 %v999, 1.442695
    %v1044 = vpow.pop %v1043
    %v1045 = vmul.f32 %v1000, 1.442695
    %v1046 = vpow.pop %v1045
    %v1047 = vmul.f32 %v1001, 1.442695
    %v1048 = vpow.pop %v1047
    %v1049 = vmul.f32 %v1002, 1.442695
    %v1050 = vpow.pop %v1049
    %v1051 = vmul.f32 %v1003, 1.442695
    %v1052 = vpow.pop %v1051
    %v1053 = vmul.f32 %v1004, 1.442695
    %v1054 = vpow.pop %v1053
    %v1055 = vmul.f32 %v1005, 1.442695
    %v1056 = vpow.pop %v1055
    %v1057 = vmul.f32 %v1006, 1.442695
    %v1058 = vpow.pop %v1057
    %v1059 = vmul.f32 %v1007, 1.442695
    %v1060 = vpow.pop %v1059
    %v1061 = vmul.f32 %v1008, 1.442695
    %v1062 = vpow.pop %v1061
    %v1063 = vmul.f32 %v1009, 1.442695
    %v1064 = vpow.pop %v1063
    %v1065 = vmul.f32 %v1010, 1.442695
    %v1066 = vpow.pop %v1065
    %v1067 = vmul.f32 %v1011, 1.442695
    %v1068 = vpow.pop %v1067
    %v1069 = vmul.f32 %v1012, 1.442695
    %v1070 = vpow.pop %v1069
    %v1071 = vmul.f32 %v1013, 1.442695
    %v1072 = vpow.pop %v1071
    %v1073 = vmul.f32 %v1014, 1.442695
    %v1074 = vpow.pop %v1073
    %v1075 = vmul.f32 %v1015, 1.442695
    %v1076 = vpow.pop %v1075
    %v1077 = vmul.f32 %v1016, 1.442695
    %v1078 = vpow.pop %v1077
    %v1079 = vmul.f32 %v1017, 1.442695
    %v1080 = vpow.pop %v1079
    %v1081 = vmul.f32 %v1018, 1.442695
    %v1082 = vpow.pop %v1081
    %1083 = vst [vmem:[#allocation2] sm:$0xff] %v1020
    %1084 = vst [vmem:[#allocation2 + $0x8] sm:$0xff] %v1022
    %1085 = vst [vmem:[#allocation2 + $0x10] sm:$0xff] %v1024
    %1086 = vst [vmem:[#allocation2 + $0x18] sm:$0xff] %v1026
    %1087 = vst [vmem:[#allocation2 + $0x20] sm:$0xff] %v1028
    %1088 = vst [vmem:[#allocation2 + $0x28] sm:$0xff] %v1030
    %1089 = vst [vmem:[#allocation2 + $0x30] sm:$0xff] %v1032
    %1090 = vst [vmem:[#allocation2 + $0x38] sm:$0xff] %v1034
    %1091 = vst [vmem:[#allocation2 + $0x40] sm:$0xff] %v1036
    %1092 = vst [vmem:[#allocation2 + $0x48] sm:$0xff] %v1038
    %1093 = vst [vmem:[#allocation2 + $0x50] sm:$0xff] %v1040
    %1094 = vst [vmem:[#allocation2 + $0x58] sm:$0xff] %v1042
    %1095 = vst [vmem:[#allocation2 + $0x60] sm:$0xff] %v1044
    %1096 = vst [vmem:[#allocation2 + $0x68] sm:$0xff] %v1046
    %1097 = vst [vmem:[#allocation2 + $0x70] sm:$0xff] %v1048
    %1098 = vst [vmem:[#allocation2 + $0x78] sm:$0xff] %v1050
    %1099 = vst [vmem:[#allocation2 + $0x80] sm:$0xff] %v1052
    %1100 = vst [vmem:[#allocation2 + $0x88] sm:$0xff] %v1054
    %1101 = vst [vmem:[#allocation2 + $0x90] sm:$0xff] %v1056
    %1102 = vst [vmem:[#allocation2 + $0x98] sm:$0xff] %v1058
    %1103 = vst [vmem:[#allocation2 + $0xa0] sm:$0xff] %v1060
    %1104 = vst [vmem:[#allocation2 + $0xa8] sm:$0xff] %v1062
    %1105 = vst [vmem:[#allocation2 + $0xb0] sm:$0xff] %v1064
    %1106 = vst [vmem:[#allocation2 + $0xb8] sm:$0xff] %v1066
    %1107 = vst [vmem:[#allocation2 + $0xc0] sm:$0xff] %v1068
    %1108 = vst [vmem:[#allocation2 + $0xc8] sm:$0xff] %v1070
    %1109 = vst [vmem:[#allocation2 + $0xd0] sm:$0xff] %v1072
    %1110 = vst [vmem:[#allocation2 + $0xd8] sm:$0xff] %v1074
    %1111 = vst [vmem:[#allocation2 + $0xe0] sm:$0xff] %v1076
    %1112 = vst [vmem:[#allocation2 + $0xe8] sm:$0xff] %v1078
    %1113 = vst [vmem:[#allocation2 + $0xf0] sm:$0xff] %v1080
    %1114 = vst [vmem:[#allocation2 + $0xf8] sm:$0xff] %v1082
    // Predicated region
    $region18: #{tpu_custom_call.1} parent=1 // pred_check
      _
    $region19: #{tpu_custom_call.1} parent=1 // pred_check_branch
      %1116 = sbr.rel (0) target = $region21
    $region20: #{tpu_custom_call.1} parent=1 // pred_region
      %s1118 = ssub.s32 4096, 4096
      %1119 = vsyncadd [#allocation3], %s1118
      %s1120 = sshll.u32 [#allocation2], 4
      %s1121 = int_to_ptr.vmem [resolvable:$true] %s1120
      %1126 = dma.vmem_to_hbm [thread:$0]  %s1121, 4096, %s4, [#allocation3], 128, 128, 8
    $region21: #{tpu_custom_call.1} parent=1 // pred_fallthru
      _
    // Predicated region
    $region22: #{tpu_custom_call.1} parent=1 // pred_check
      _
    $region23: #{tpu_custom_call.1} parent=1 // pred_check_branch
      %1128 = sbr.rel (0) target = $region25
    $region24: #{tpu_custom_call.1} parent=1 // pred_region
      %1129 = dma.done [#allocation3], 4096
    $region25: #{tpu_custom_call.1} parent=1 // pred_fallthru
      _
    %1130 = vsyncpa [#allocation3], 1

</llo_original>
